<compile_context>
chip_gen: v6e
topology: v6e:2x2x1
jax: 0.10.0
libtpu: 0.0.40
codegen_flags: <defaults>
</compile_context>

<pallas_src>
import functools

import jax
import jax.numpy as jnp
from jax.experimental import pallas as pl
from jax.experimental.pallas import tpu as pltpu

_SUBLANE = 8
_LANE = 128
_MAX_BLOCK_B = 4096        # VMEM cap: ~4 KB/row incl. double buffering (v7x: 64 MiB)


def _round_up(x, m):
    return ((x + m - 1) // m) * m


def _qnet_kernel(x_ref, w1_ref, b1_ref, w2_ref, b2_ref, w3_ref, b3_ref, out_ref):
    # Three block-diagonal matmuls with f32 accumulation.  Bias-add / ReLU stay
    # in f32 (v5e VPU has no bf16 arithmetic); operands are cast back to the
    # (possibly bf16) weight dtype before each MXU push so bf16 streaming still
    # hits the bf16-native MXU path on v6e/v7x.
    w_dtype = w1_ref.dtype
    h = jnp.dot(x_ref[...], w1_ref[...], preferred_element_type=jnp.float32)
    h = jnp.maximum(h + b1_ref[...], 0.0)                      # (TB, A*64)  f32
    h = jnp.dot(h.astype(w_dtype), w2_ref[...], preferred_element_type=jnp.float32)
    h = jnp.maximum(h + b2_ref[...], 0.0)                      # (TB, A*32)  f32
    q = jnp.dot(h.astype(w_dtype), w3_ref[...], preferred_element_type=jnp.float32)
    out_ref[...] = (q + b3_ref[...]).astype(out_ref.dtype)     # lane-dense store
    # NOTE: at toy sizes this kernel is ~100% fixed overhead; the real win there
    # is fusing downstream work (per-agent argmax / eps-greedy / VDN sum) into
    # this epilogue — not done here because it changes the module's output.


def _pick_block_b(batch, block_b):
    """Batch-tile selection: multiple of 8, capped for VMEM, and (auto path,
    large B) small enough to give >= 2 grid steps so the pipeline overlaps and
    v7x's two TensorCores both get work."""
    if block_b is not None:
        bb = _round_up(max(int(block_b), _SUBLANE), _SUBLANE)
    elif batch < 2 * _SUBLANE:
        bb = _round_up(batch, _SUBLANE)                  # latency regime: one step
    else:
        bb = min(2048, _round_up((batch + 1) // 2, _SUBLANE))
    return max(_SUBLANE, min(bb, _MAX_BLOCK_B))


def _vmem_limit_bytes(bb, in_w, h1w, h2w, out_w, x_item):
    lane = lambda n: _round_up(n, _LANE)
    io = 2 * bb * (lane(in_w) * x_item + lane(out_w) * 4)     # double-buffered tiles
    inter = bb * (lane(h1w) + lane(h2w)) * 4                  # f32 intermediates
    wts = ((in_w * h1w + h1w * h2w + h2w * out_w) * x_item
           + (h1w + h2w + out_w) * 4)
    est = io + inter + 2 * wts + (4 << 20)                    # + compiler scratch margin
    # Explicit limit: above v5e's 16 MiB scoped default, below v7x's 64 MiB physical.
    return int(min(max(est, 32 << 20), 48 << 20))


@functools.partial(jax.jit, static_argnames=("n_act", "block_b"))
def qnet_forward(obs, packed, *, n_act, block_b=None):
    """obs: (B, A, n_obs).  packed: dict from pack_params().  n_act: per-agent
    action count (static).  Returns (B, A, n_act) float32 Q-values."""
    B, A, n_obs = obs.shape
    in_w = A * n_obs
    h1w = packed["w1"].shape[1]           # A * 64
    h2w = packed["w2"].shape[1]           # A * 32
    out_wp = packed["w3"].shape[1]        # A * n_act, possibly lane-padded to 128
    out_w = A * n_act
    w_dtype = packed["w1"].dtype
    x_item = jnp.dtype(w_dtype).itemsize

    # Contiguous minor-dim collapse (layout no-op) + stream-dtype cast (bf16 on
    # v6e/v7x halves the HBM-bound obs read; ideally the producer already emits
    # bf16 so this cast fuses away upstream).
    x2d = obs.reshape(B, in_w).astype(w_dtype)

    # Explicit batch tiling: round block_b to a multiple of 8 and zero-pad the
    # batch up to a multiple of it (no silent fallback to a single step).
    bb = _pick_block_b(B, block_b)
    Bp = _round_up(B, bb)
    if Bp != B:
        x2d = jnp.pad(x2d, ((0, Bp - B), (0, 0)))
    grid = (Bp // bb,)

    cost = pl.CostEstimate(
        flops=2 * Bp * (in_w * h1w + h1w * h2w + h2w * out_wp),
        transcendentals=0,
        bytes_accessed=(Bp * (in_w * x_item + out_wp * 4)
                        + (in_w * h1w + h1w * h2w + h2w * out_wp) * x_item
                        + (h1w + h2w + out_wp) * 4),
    )

    out2d = pl.pallas_call(
        _qnet_kernel,
        out_shape=jax.ShapeDtypeStruct((Bp, out_wp), jnp.float32),
        grid_spec=pltpu.PrefetchScalarGridSpec(
            num_scalar_prefetch=0,
            grid=grid,
            in_specs=[
                pl.BlockSpec((bb, in_w), lambda i: (i, 0)),      # obs tile (streamed)
                # Weights/biases: constant index_map -> VMEM-resident across steps.
                # (pipeline_mode=pl.Buffered(1) would drop their second buffer;
                #  at A=3 that is ~0.1 MB so it is left at the default here.)
                pl.BlockSpec((in_w, h1w), lambda i: (0, 0)),     # W1 block-diag
                pl.BlockSpec((1, h1w), lambda i: (0, 0)),        # b1 (f32)
                pl.BlockSpec((h1w, h2w), lambda i: (0, 0)),      # W2 block-diag
                pl.BlockSpec((1, h2w), lambda i: (0, 0)),        # b2 (f32)
                pl.BlockSpec((h2w, out_wp), lambda i: (0, 0)),   # W3 block-diag
                pl.BlockSpec((1, out_wp), lambda i: (0, 0)),     # b3 (f32)
            ],
            out_specs=pl.BlockSpec((bb, out_wp), lambda i: (i, 0)),
        ),
        compiler_params=pltpu.CompilerParams(
            dimension_semantics=("parallel",),
            vmem_limit_bytes=_vmem_limit_bytes(bb, in_w, h1w, h2w, out_wp, x_item),
        ),
        cost_estimate=cost,
    )(x2d, packed["w1"], packed["b1"], packed["w2"], packed["b2"],
      packed["w3"], packed["b3"])

    # Drop batch padding / lane padding; split minor dims back to (B, A, n_act).
    return out2d[:B, :out_w].reshape(B, A, n_act)


def pack_params(params, *, dtype=jnp.float32, pad_out_to_lanes=False):
    """Pack stacked per-agent weights into block-diagonal form (one-time, off the
    hot path — weights are reused across many forward calls).

    dtype: storage/stream dtype for the weight matrices.  bfloat16 is recommended
      on v6e/v7x (halves HBM traffic and VMEM; MXU is bf16-native; accumulation
      in the kernel stays f32).  Biases are kept f32 (tiny; the bias-add/ReLU is
      done in f32 so v5e's VPU never sees bf16 arithmetic).
    pad_out_to_lanes: zero-pad W3/b3 output columns to a multiple of 128 so the
      kernel writes a lane-dense output tile (no masked vst.msk partial stores).
      Use for the small-batch / latency regime; leave False for very large
      batches where it inflates HBM writeback per row.

    NOTE: block-diagonal weights scale as A^2; at A >~ 16-32 switch to a
    per-agent grid axis (agent-indexed BlockSpec over (A, din, dout)) instead.
    """
    def blockdiag(w):                     # w: (A, din, dout)
        A, din, dout = w.shape
        eye = jnp.eye(A, dtype=w.dtype)
        bd = jnp.einsum("aio,ab->aibo", w, eye).reshape(A * din, A * dout)
        return bd.astype(dtype)

    def cat_bias(b):                      # b: (A, 1, h) -> (1, A*h), kept f32
        A, _, h = b.shape
        return b.reshape(1, A * h).astype(jnp.float32)

    w3, b3 = blockdiag(params["w3"]), cat_bias(params["b3"])
    if pad_out_to_lanes:
        pad = _round_up(w3.shape[1], _LANE) - w3.shape[1]
        if pad:
            w3 = jnp.pad(w3, ((0, 0), (0, pad)))
            b3 = jnp.pad(b3, ((0, 0), (0, pad)))

    return {
        "w1": blockdiag(params["w1"]), "b1": cat_bias(params["b1"]),
        "w2": blockdiag(params["w2"]), "b2": cat_bias(params["b2"]),
        "w3": w3, "b3": b3,
    }


def init_params(key, num_agents, n_obs, n_act, hx_size=32, hidden=64):
    """Deterministic per-agent parameter init (PyTorch-style uniform fan-in)."""
    ks = jax.random.split(key, 6)

    def u(k, shape, fan_in):
        bound = 1.0 / jnp.sqrt(jnp.float32(fan_in))
        return jax.random.uniform(k, shape, jnp.float32, -bound, bound)

    return {
        "w1": u(ks[0], (num_agents, n_obs, hidden), n_obs),
        "b1": u(ks[1], (num_agents, 1, hidden), n_obs),
        "w2": u(ks[2], (num_agents, hidden, hx_size), hidden),
        "b2": u(ks[3], (num_agents, 1, hx_size), hidden),
        "w3": u(ks[4], (num_agents, hx_size, n_act), hx_size),
        "b3": u(ks[5], (num_agents, 1, n_act), hx_size),
    }


def qnet_reference(obs, params):
    """Pure-JAX reference mirroring the PyTorch per-agent loop."""
    outs = []
    A = obs.shape[1]
    for a in range(A):
        x = obs[:, a, :]
        h = jnp.maximum(x @ params["w1"][a] + params["b1"][a][0], 0.0)
        h = jnp.maximum(h @ params["w2"][a] + params["b2"][a][0], 0.0)
        q = h @ params["w3"][a] + params["b3"][a][0]
        outs.append(q[:, None, :])
    return jnp.concatenate(outs, axis=1)


if __name__ == "__main__":
    key = jax.random.PRNGKey(0)
    k_obs, k_par, k_obs2 = jax.random.split(key, 3)

    BATCH = 8
    NUM_AGENTS = 3
    N_OBS = 16      # observation_space[i].shape[0]
    N_ACT = 4       # action_space[i].n (uniform so torch.cat on dim=1 is valid)

    params = init_params(k_par, NUM_AGENTS, N_OBS, N_ACT)
    obs = jax.random.normal(k_obs, (BATCH, NUM_AGENTS, N_OBS), jnp.float32)
    q_ref = qnet_reference(obs, params)

    # 1) f32 weights, lane-dense output (latency regime), single 8-row tile.
    packed_f32 = pack_params(params, dtype=jnp.float32, pad_out_to_lanes=True)
    q = jax.block_until_ready(qnet_forward(obs, packed_f32, n_act=N_ACT))
    assert q.shape == (BATCH, NUM_AGENTS, N_ACT), q.shape
    assert jnp.allclose(q, q_ref, atol=1e-4, rtol=1e-4), "f32 mismatch vs reference"

    # 2) bf16 weight/obs streaming (v6e/v7x HBM-traffic win), f32 accumulation.
    packed_bf16 = pack_params(params, dtype=jnp.bfloat16, pad_out_to_lanes=True)
    q_bf16 = jax.block_until_ready(qnet_forward(obs, packed_bf16, n_act=N_ACT))
    assert q_bf16.shape == (BATCH, NUM_AGENTS, N_ACT), q_bf16.shape
    assert jnp.allclose(q_bf16, q_ref, atol=1e-1, rtol=1e-1), "bf16 mismatch"

    # 3) multi-tile pipelined path with a ragged batch (tail rows zero-padded,
    #    >=2 grid steps so v7x megacore sharding applies).
    B2 = 100
    obs2 = jax.random.normal(k_obs2, (B2, NUM_AGENTS, N_OBS), jnp.float32)
    q2 = jax.block_until_ready(qnet_forward(obs2, packed_f32, n_act=N_ACT))
    assert q2.shape == (B2, NUM_AGENTS, N_ACT), q2.shape
    q2_ref = qnet_reference(obs2, params)
    assert jnp.allclose(q2, q2_ref, atol=1e-4, rtol=1e-4), "tiled mismatch"

    print("KERNEL_OK")
</pallas_src>

<mosaic_0001>
module attributes {stable_mosaic.version = 11 : i64} {
  func.func @_qnet_kernel(%arg0: i32, %arg1: memref<8x48xf32, #tpu.memory_space<vmem>>, %arg2: memref<48x192xf32, #tpu.memory_space<vmem>>, %arg3: memref<1x192xf32, #tpu.memory_space<vmem>>, %arg4: memref<192x96xf32, #tpu.memory_space<vmem>>, %arg5: memref<1x96xf32, #tpu.memory_space<vmem>>, %arg6: memref<96x128xf32, #tpu.memory_space<vmem>>, %arg7: memref<1x128xf32, #tpu.memory_space<vmem>>, %arg8: memref<8x128xf32, #tpu.memory_space<vmem>>) attributes {dimension_semantics = [#tpu.dimension_semantics<parallel>], iteration_bounds = array<i64: 1>, scalar_prefetch = 0 : i64, scratch_operands = 0 : i64, tpu.core_type = #tpu.core_type<tc>, window_params = [{transform_indices = @transform_0, window_bounds = array<i64: 8, 48>}, {pipeline_mode = #tpu.pipeline_mode<synchronous>, transform_indices = @transform_1, window_bounds = array<i64: 48, 192>}, {pipeline_mode = #tpu.pipeline_mode<synchronous>, transform_indices = @transform_2, window_bounds = array<i64: 1, 192>}, {pipeline_mode = #tpu.pipeline_mode<synchronous>, transform_indices = @transform_3, window_bounds = array<i64: 192, 96>}, {pipeline_mode = #tpu.pipeline_mode<synchronous>, transform_indices = @transform_4, window_bounds = array<i64: 1, 96>}, {pipeline_mode = #tpu.pipeline_mode<synchronous>, transform_indices = @transform_5, window_bounds = array<i64: 96, 128>}, {pipeline_mode = #tpu.pipeline_mode<synchronous>, transform_indices = @transform_6, window_bounds = array<i64: 1, 128>}, {transform_indices = @transform_7, window_bounds = array<i64: 8, 128>}]} {
    %c0 = arith.constant 0 : index
    %c0_0 = arith.constant 0 : index
    %0 = vector.load %arg1[%c0, %c0_0] : memref<8x48xf32, #tpu.memory_space<vmem>>, vector<8x48xf32>
    %c0_1 = arith.constant 0 : index
    %c0_2 = arith.constant 0 : index
    %1 = vector.load %arg2[%c0_1, %c0_2] : memref<48x192xf32, #tpu.memory_space<vmem>>, vector<48x192xf32>
    %cst = arith.constant dense<0.000000e+00> : vector<8x192xf32>
    %2 = tpu.matmul %0, %1, %cst {dimension_numbers = #tpu.dot_dimension_numbers<[1], [0], [0], [1], [0, 0, 1, 1], [], []>} : vector<8x48xf32>, vector<48x192xf32>, vector<8x192xf32> -> vector<8x192xf32>
    %c0_3 = arith.constant 0 : index
    %c0_4 = arith.constant 0 : index
    %3 = vector.load %arg3[%c0_3, %c0_4] : memref<1x192xf32, #tpu.memory_space<vmem>>, vector<1x192xf32>
    %4 = vector.broadcast %3 : vector<1x192xf32> to vector<8x192xf32>
    %5 = arith.addf %2, %4 : vector<8x192xf32>
    %cst_5 = arith.constant 0.000000e+00 : f32
    %6 = vector.broadcast %cst_5 : f32 to vector<8x192xf32>
    %7 = arith.maximumf %5, %6 : vector<8x192xf32>
    %c0_6 = arith.constant 0 : index
    %c0_7 = arith.constant 0 : index
    %8 = vector.load %arg4[%c0_6, %c0_7] : memref<192x96xf32, #tpu.memory_space<vmem>>, vector<192x96xf32>
    %cst_8 = arith.constant dense<0.000000e+00> : vector<8x96xf32>
    %9 = tpu.matmul %7, %8, %cst_8 {dimension_numbers = #tpu.dot_dimension_numbers<[1], [0], [0], [1], [0, 0, 1, 1], [], []>} : vector<8x192xf32>, vector<192x96xf32>, vector<8x96xf32> -> vector<8x96xf32>
    %c0_9 = arith.constant 0 : index
    %c0_10 = arith.constant 0 : index
    %10 = vector.load %arg5[%c0_9, %c0_10] : memref<1x96xf32, #tpu.memory_space<vmem>>, vector<1x96xf32>
    %11 = vector.broadcast %10 : vector<1x96xf32> to vector<8x96xf32>
    %12 = arith.addf %9, %11 : vector<8x96xf32>
    %cst_11 = arith.constant 0.000000e+00 : f32
    %13 = vector.broadcast %cst_11 : f32 to vector<8x96xf32>
    %14 = arith.maximumf %12, %13 : vector<8x96xf32>
    %c0_12 = arith.constant 0 : index
    %c0_13 = arith.constant 0 : index
    %15 = vector.load %arg6[%c0_12, %c0_13] : memref<96x128xf32, #tpu.memory_space<vmem>>, vector<96x128xf32>
    %cst_14 = arith.constant dense<0.000000e+00> : vector<8x128xf32>
    %16 = tpu.matmul %14, %15, %cst_14 {dimension_numbers = #tpu.dot_dimension_numbers<[1], [0], [0], [1], [0, 0, 1, 1], [], []>} : vector<8x96xf32>, vector<96x128xf32>, vector<8x128xf32> -> vector<8x128xf32>
    %c0_15 = arith.constant 0 : index
    %c0_16 = arith.constant 0 : index
    %17 = vector.load %arg7[%c0_15, %c0_16] : memref<1x128xf32, #tpu.memory_space<vmem>>, vector<1x128xf32>
    %18 = vector.broadcast %17 : vector<1x128xf32> to vector<8x128xf32>
    %19 = arith.addf %16, %18 : vector<8x128xf32>
    %c0_17 = arith.constant 0 : index
    %c0_18 = arith.constant 0 : index
    %20 = vector.load %arg8[%c0_17, %c0_18] : memref<8x128xf32, #tpu.memory_space<vmem>>, vector<8x128xf32>
    tpu.vector_store %arg8[%c0_17, %c0_18], %19 {strides = array<i32>} : memref<8x128xf32, #tpu.memory_space<vmem>>, vector<8x128xf32>,
    return
  }
  func.func @transform_0(%arg0: i32) -> (i32, i32) {
    %c0_i32 = arith.constant 0 : i32
    %c0_i32_0 = arith.constant 0 : i32
    return %arg0, %c0_i32 : i32, i32
  }
  func.func @transform_1(%arg0: i32) -> (i32, i32) {
    %c0_i32 = arith.constant 0 : i32
    %c0_i32_0 = arith.constant 0 : i32
    %c0_i32_1 = arith.constant 0 : i32
    return %c0_i32, %c0_i32_0 : i32, i32
  }
  func.func @transform_2(%arg0: i32) -> (i32, i32) {
    %c0_i32 = arith.constant 0 : i32
    %c0_i32_0 = arith.constant 0 : i32
    %c0_i32_1 = arith.constant 0 : i32
    return %c0_i32, %c0_i32_0 : i32, i32
  }
  func.func @transform_3(%arg0: i32) -> (i32, i32) {
    %c0_i32 = arith.constant 0 : i32
    %c0_i32_0 = arith.constant 0 : i32
    %c0_i32_1 = arith.constant 0 : i32
    return %c0_i32, %c0_i32_0 : i32, i32
  }
  func.func @transform_4(%arg0: i32) -> (i32, i32) {
    %c0_i32 = arith.constant 0 : i32
    %c0_i32_0 = arith.constant 0 : i32
    %c0_i32_1 = arith.constant 0 : i32
    return %c0_i32, %c0_i32_0 : i32, i32
  }
  func.func @transform_5(%arg0: i32) -> (i32, i32) {
    %c0_i32 = arith.constant 0 : i32
    %c0_i32_0 = arith.constant 0 : i32
    %c0_i32_1 = arith.constant 0 : i32
    return %c0_i32, %c0_i32_0 : i32, i32
  }
  func.func @transform_6(%arg0: i32) -> (i32, i32) {
    %c0_i32 = arith.constant 0 : i32
    %c0_i32_0 = arith.constant 0 : i32
    %c0_i32_1 = arith.constant 0 : i32
    return %c0_i32, %c0_i32_0 : i32, i32
  }
  func.func @transform_7(%arg0: i32) -> (i32, i32) {
    %c0_i32 = arith.constant 0 : i32
    %c0_i32_0 = arith.constant 0 : i32
    return %arg0, %c0_i32 : i32, i32
  }
}

</mosaic_0001>

<llo_original>
// kernel: qnet_forward.1
$region0: #{qnet_forward.1}
  #allocation0 [shape = 'u32[]', space=smem, size = 0x4, offset = 0x4, fixed_abs, tag = 'smem constant byte address 0x4 - core index']
  #allocation1 [shape = 'u32[144,128]{1,0:T(1,128)}', space=vmem, size = 0x12000, scoped, tag = 'internal scratch']
  %s0 = inlined_call_operand.vmem [shape: f32[8,48], index: 0, kind: input, shape index: {}]
  %s1 = inlined_call_operand.vmem [shape: f32[48,192], index: 1, kind: input, shape index: {}]
  %s2 = inlined_call_operand.vmem [shape: f32[1,192], index: 2, kind: input, shape index: {}]
  %s3 = inlined_call_operand.hbm [shape: f32[192,96], index: 3, kind: input, shape index: {}]
  %s4 = inlined_call_operand.vmem [shape: f32[1,96], index: 4, kind: input, shape index: {}]
  %s5 = inlined_call_operand.hbm [shape: f32[96,128], index: 5, kind: input, shape index: {}]
  %s6 = inlined_call_operand.vmem [shape: f32[1,128], index: 6, kind: input, shape index: {}]
  %s7 = inlined_call_operand.vmem [shape: f32[8,128], index: 7, kind: output, shape index: {}]
  %s8 = sld [smem:[#allocation0]]
  $region46: #{qnet_forward.1} parent=0
    _
  %s10 = ssub.s32 1, %s8
  %s11 = scalar_select 0, %s10, %s8
  $region1: #{qnet_forward.1} parent=0
    #allocation2 [shape = 'u8[98304]{0}', space=vmem, size = 0x18000, scoped, tag = 'input window, operand 3, single buffered']
    #allocation3 [shape = 's32[1]{0}', space=sflag, size = 0x4, scoped, tag = 'scoped memory for qnet_forward.1']
    #allocation4 [shape = 'u8[49152]{0}', space=vmem, size = 0xc000, scoped, tag = 'input window, operand 5, single buffered']
    #allocation5 [shape = 's32[1]{0}', space=sflag, size = 0x4, scoped, tag = 'scoped memory for qnet_forward.1']
    %12 = vsyncpa [#allocation3], 0
    %13 = vsyncpa [#allocation5], 0
    // Predicated region
    $region2: #{qnet_forward.1} parent=1 // pred_check
      _
    $region3: #{qnet_forward.1} parent=1 // pred_check_branch
      %15 = sbr.rel (0) target = $region5
    $region4: #{qnet_forward.1} parent=1 // pred_region
      _
    $region5: #{qnet_forward.1} parent=1 // pred_fallthru
      _
    // Predicated region
    $region6: #{qnet_forward.1} parent=1 // pred_check
      _
    $region7: #{qnet_forward.1} parent=1 // pred_check_branch
      %17 = sbr.rel (0) target = $region9
    $region8: #{qnet_forward.1} parent=1 // pred_region
      _
    $region9: #{qnet_forward.1} parent=1 // pred_fallthru
      _
    // Predicated region
    $region10: #{qnet_forward.1} parent=1 // pred_check
      _
    $region11: #{qnet_forward.1} parent=1 // pred_check_branch
      %19 = sbr.rel (0) target = $region13
    $region12: #{qnet_forward.1} parent=1 // pred_region
      _
    $region13: #{qnet_forward.1} parent=1 // pred_fallthru
      _
    // Predicated region
    $region14: #{qnet_forward.1} parent=1 // pred_check
      _
    $region15: #{qnet_forward.1} parent=1 // pred_check_branch
      %21 = sbr.rel (0) target = $region17
    $region16: #{qnet_forward.1} parent=1 // pred_region
      %s23 = ssub.s32 3072, 3072
      %24 = vsyncadd [#allocation3], %s23
      %s25 = sshll.u32 [#allocation2], 4
      %s26 = int_to_ptr.vmem [resolvable:$true] %s25
      %31 = dma.hbm_to_vmem [thread:$0]  %s3, 3072, %s26, [#allocation3], 128, 128, 8
    $region17: #{qnet_forward.1} parent=1 // pred_fallthru
      _
    // Predicated region
    $region18: #{qnet_forward.1} parent=1 // pred_check
      _
    $region19: #{qnet_forward.1} parent=1 // pred_check_branch
      %33 = sbr.rel (0) target = $region21
    $region20: #{qnet_forward.1} parent=1 // pred_region
      _
    $region21: #{qnet_forward.1} parent=1 // pred_fallthru
      _
    // Predicated region
    $region22: #{qnet_forward.1} parent=1 // pred_check
      _
    $region23: #{qnet_forward.1} parent=1 // pred_check_branch
      %35 = sbr.rel (0) target = $region25
    $region24: #{qnet_forward.1} parent=1 // pred_region
      %s37 = ssub.s32 1536, 1536
      %38 = vsyncadd [#allocation5], %s37
      %s39 = sshll.u32 [#allocation4], 4
      %s40 = int_to_ptr.vmem [resolvable:$true] %s39
      %45 = dma.hbm_to_vmem [thread:$0]  %s5, 1536, %s40, [#allocation5], 128, 128, 8
    $region25: #{qnet_forward.1} parent=1 // pred_fallthru
      _
    // Predicated region
    $region26: #{qnet_forward.1} parent=1 // pred_check
      _
    $region27: #{qnet_forward.1} parent=1 // pred_check_branch
      %47 = sbr.rel (0) target = $region29
    $region28: #{qnet_forward.1} parent=1 // pred_region
      _
    $region29: #{qnet_forward.1} parent=1 // pred_fallthru
      _
    // Predicated region
    $region30: #{qnet_forward.1} parent=1 // pred_check
      _
    $region31: #{qnet_forward.1} parent=1 // pred_check_branch
      %49 = sbr.rel (0) target = $region33
    $region32: #{qnet_forward.1} parent=1 // pred_region
      %50 = dma.done [#allocation3], 3072
    $region33: #{qnet_forward.1} parent=1 // pred_fallthru
      _
    // Predicated region
    $region34: #{qnet_forward.1} parent=1 // pred_check
      _
    $region35: #{qnet_forward.1} parent=1 // pred_check_branch
      %52 = sbr.rel (0) target = $region37
    $region36: #{qnet_forward.1} parent=1 // pred_region
      %53 = dma.done [#allocation5], 1536
    $region37: #{qnet_forward.1} parent=1 // pred_fallthru
      _
    %v54 = vld [vmem:[%s0] sm:$0xff]
    %v55 = vld [vmem:[%s1] sm:$0xff]
    %v56 = vld [vmem:[%s1 + $0x8] sm:$0xff]
    %v57 = vld [vmem:[%s1 + $0x10] sm:$0xff]
    %v58 = vld [vmem:[%s1 + $0x18] sm:$0xff]
    %v59 = vld [vmem:[%s1 + $0x20] sm:$0xff]
    %v60 = vld [vmem:[%s1 + $0x28] sm:$0xff]
    %v61 = vld [vmem:[%s1 + $0x30] sm:$0xff]
    %v62 = vld [vmem:[%s1 + $0x38] sm:$0xff]
    %v63 = vld [vmem:[%s1 + $0x40] sm:$0xff]
    %v64 = vld [vmem:[%s1 + $0x48] sm:$0xff]
    %v65 = vld [vmem:[%s1 + $0x50] sm:$0xff]
    %v66 = vld [vmem:[%s1 + $0x58] sm:$0xff]
    %v67 = vld [vmem:[%s2] sm:$0x3]
    %v69 = vlaneseq
    %v70 = vshrl.u32 %v69, 7
    %v71 = vsub.s32 0, %v70
    %v72 = vrot.slane %v67, %v71
    %v73 = vlaneseq
    %v74 = vshrl.u32 %v73, 7
    %v75 = vsub.s32 1, %v74
    %v76 = vrot.slane %v67, %v75
    %vm79 = vcmask 392192
    %v81 = vsel %vm79, %v54, 0
    %83 = vmatprep.subr.mxu0 0.0
    %84 = vmatpush1.msra.mxu0 0.0
    %85 = vmatprep.subr.mxu0 0.0
    %86 = vmatpush1.msra.mxu0 0.0
    %87 = vmatprep.subr.mxu0 0.0
    %88 = vmatpush1.msra.mxu0 0.0
    %89 = vmatprep.subr.mxu0 0.0
    %90 = vmatpush1.msra.mxu0 0.0
    %91 = vmatprep.subr.mxu0 0.0
    %92 = vmatpush1.msra.mxu0 0.0
    %93 = vmatprep.subr.mxu0 0.0
    %94 = vmatpush1.msra.mxu0 0.0
    %95 = vmatprep.subr.mxu0 0.0
    %96 = vmatpush1.msra.mxu0 0.0
    %97 = vmatprep.subr.mxu0 0.0
    %98 = vmatpush1.msra.mxu0 0.0
    %99 = vmatprep.subr.mxu0 0.0
    %100 = vmatpush1.msra.mxu0 0.0
    %101 = vmatprep.subr.mxu0 0.0
    %102 = vmatpush1.msra.mxu0 0.0
    %103 = vmatprep.subr.mxu0 %v66
    %104 = vmatpush1.msra.mxu0 %v65
    %105 = vmatprep.subr.mxu0 %v64
    %106 = vmatpush1.msra.mxu0 %v63
    %107 = vmatprep.subr.mxu0 %v62
    %108 = vmatpush1.msra.mxu0 %v61
    %109 = vmatprep.subr.mxu0 %v60
    %110 = vmatpush1.msra.mxu0 %v59
    %111 = vmatprep.subr.mxu0 %v58
    %112 = vmatpush1.msra.mxu0 %v57
    %113 = vmatprep.subr.mxu0 %v56
    %114 = vmatpush1.msra.mxu0 %v55
    %115 = vmatprep.subr.mxu0 0.0
    %116 = vmatpush2.msra.mxu0 0.0
    %117 = vmatprep.subr.mxu0 0.0
    %118 = vmatpush2.msra.mxu0 0.0
    %119 = vmatprep.subr.mxu0 0.0
    %120 = vmatpush2.msra.mxu0 0.0
    %121 = vmatprep.subr.mxu0 0.0
    %122 = vmatpush2.msra.mxu0 0.0
    %123 = vmatprep.subr.mxu0 0.0
    %124 = vmatpush2.msra.mxu0 0.0
    %125 = vmatprep.subr.mxu0 0.0
    %126 = vmatpush2.msra.mxu0 0.0
    %127 = vmatprep.subr.mxu0 0.0
    %128 = vmatpush2.msra.mxu0 0.0
    %129 = vmatprep.subr.mxu0 0.0
    %130 = vmatpush2.msra.mxu0 0.0
    %131 = vmatprep.subr.mxu0 0.0
    %132 = vmatpush2.msra.mxu0 0.0
    %133 = vmatprep.subr.mxu0 0.0
    %134 = vmatpush2.msra.mxu0 0.0
    %135 = vmatprep.subr.mxu0 0.0
    %136 = vmatpush2.msra.mxu0 0.0
    %137 = vmatprep.subr.mxu0 0.0
    %138 = vmatpush2.msra.mxu0 0.0
    %139 = vmatprep.subr.mxu0 0.0
    %140 = vmatpush2.msra.mxu0 0.0
    %141 = vmatprep.subr.mxu0 0.0
    %142 = vmatpush2.msra.mxu0 0.0
    %143 = vmatprep.subr.mxu0 0.0
    %144 = vmatpush2.msra.mxu0 0.0
    %145 = vmatprep.subr.mxu0 0.0
    %146 = vmatpush2.msra.mxu0 0.0
    %147 = vmatprep.mubr.f32.mxu0 0.0
    %148 = vmatmul.mubr.f32.gmra.mxu0 %v81
    %v149 = vpop.f32.mrf.mxu0
    %v150 = vadd.f32 %v72, %v149
    %v151 = vpop.f32.mrf.mxu0
    %v152 = vadd.f32 %v76, %v151
    %153 = vdwg.mxu0
    %v154 = vmax.f32 %v150, 0.0
    %v155 = vmax.f32 %v152, 0.0
    %v156 = vld [vmem:[#allocation2] sm:$0xff]
    %v157 = vld [vmem:[#allocation2 + $0x8] sm:$0xff]
    %v158 = vld [vmem:[#allocation2 + $0x10] sm:$0xff]
    %v159 = vld [vmem:[#allocation2 + $0x18] sm:$0xff]
    %v160 = vld [vmem:[#allocation2 + $0x20] sm:$0xff]
    %v161 = vld [vmem:[#allocation2 + $0x28] sm:$0xff]
    %v162 = vld [vmem:[#allocation2 + $0x30] sm:$0xff]
    %v163 = vld [vmem:[#allocation2 + $0x38] sm:$0xff]
    %v164 = vld [vmem:[#allocation2 + $0x40] sm:$0xff]
    %v165 = vld [vmem:[#allocation2 + $0x48] sm:$0xff]
    %v166 = vld [vmem:[#allocation2 + $0x50] sm:$0xff]
    %v167 = vld [vmem:[#allocation2 + $0x58] sm:$0xff]
    %v168 = vld [vmem:[#allocation2 + $0x60] sm:$0xff]
    %v169 = vld [vmem:[#allocation2 + $0x68] sm:$0xff]
    %v170 = vld [vmem:[#allocation2 + $0x70] sm:$0xff]
    %v171 = vld [vmem:[#allocation2 + $0x78] sm:$0xff]
    %v172 = vld [vmem:[#allocation2 + $0x80] sm:$0xff]
    %v173 = vld [vmem:[#allocation2 + $0x88] sm:$0xff]
    %v174 = vld [vmem:[#allocation2 + $0x90] sm:$0xff]
    %v175 = vld [vmem:[#allocation2 + $0x98] sm:$0xff]
    %v176 = vld [vmem:[#allocation2 + $0xa0] sm:$0xff]
    %v177 = vld [vmem:[#allocation2 + $0xa8] sm:$0xff]
    %v178 = vld [vmem:[#allocation2 + $0xb0] sm:$0xff]
    %v179 = vld [vmem:[#allocation2 + $0xb8] sm:$0xff]
    %v180 = vld [vmem:[%s4] sm:$0x1]
    %v182 = vlaneseq
    %v183 = vshrl.u32 %v182, 7
    %v184 = vsub.s32 0, %v183
    %v185 = vrot.slane %v180, %v184
    %vm187 = vcmask 523264
    %v189 = vsel %vm187, %v155, 0
    %191 = vmatprep.subr.mxu0 0.0
    %192 = vmatpush1.msra.mxu0 %v171
    %193 = vmatprep.subr.mxu0 0.0
    %194 = vmatpush1.msra.mxu0 %v170
    %195 = vmatprep.subr.mxu0 0.0
    %196 = vmatpush1.msra.mxu0 %v169
    %197 = vmatprep.subr.mxu0 0.0
    %198 = vmatpush1.msra.mxu0 %v168
    %199 = vmatprep.subr.mxu0 0.0
    %200 = vmatpush1.msra.mxu0 %v167
    %201 = vmatprep.subr.mxu0 0.0
    %202 = vmatpush1.msra.mxu0 %v166
    %203 = vmatprep.subr.mxu0 0.0
    %204 = vmatpush1.msra.mxu0 %v165
    %205 = vmatprep.subr.mxu0 0.0
    %206 = vmatpush1.msra.mxu0 %v164
    %207 = vmatprep.subr.mxu0 0.0
    %208 = vmatpush1.msra.mxu0 %v163
    %209 = vmatprep.subr.mxu0 0.0
    %210 = vmatpush1.msra.mxu0 %v162
    %211 = vmatprep.subr.mxu0 0.0
    %212 = vmatpush1.msra.mxu0 %v161
    %213 = vmatprep.subr.mxu0 0.0
    %214 = vmatpush1.msra.mxu0 %v160
    %215 = vmatprep.subr.mxu0 0.0
    %216 = vmatpush1.msra.mxu0 %v159
    %217 = vmatprep.subr.mxu0 0.0
    %218 = vmatpush1.msra.mxu0 %v158
    %219 = vmatprep.subr.mxu0 0.0
    %220 = vmatpush1.msra.mxu0 %v157
    %221 = vmatprep.subr.mxu0 0.0
    %222 = vmatpush1.msra.mxu0 %v156
    %223 = vmatprep.subr.mxu0 0.0
    %224 = vmatpush2.msra.mxu0 0.0
    %225 = vmatprep.subr.mxu0 0.0
    %226 = vmatpush2.msra.mxu0 0.0
    %227 = vmatprep.subr.mxu0 0.0
    %228 = vmatpush2.msra.mxu0 0.0
    %229 = vmatprep.subr.mxu0 0.0
    %230 = vmatpush2.msra.mxu0 0.0
    %231 = vmatprep.subr.mxu0 0.0
    %232 = vmatpush2.msra.mxu0 0.0
    %233 = vmatprep.subr.mxu0 0.0
    %234 = vmatpush2.msra.mxu0 0.0
    %235 = vmatprep.subr.mxu0 0.0
    %236 = vmatpush2.msra.mxu0 0.0
    %237 = vmatprep.subr.mxu0 0.0
    %238 = vmatpush2.msra.mxu0 0.0
    %239 = vmatprep.subr.mxu0 0.0
    %240 = vmatpush2.msra.mxu0 %v179
    %241 = vmatprep.subr.mxu0 0.0
    %242 = vmatpush2.msra.mxu0 %v178
    %243 = vmatprep.subr.mxu0 0.0
    %244 = vmatpush2.msra.mxu0 %v177
    %245 = vmatprep.subr.mxu0 0.0
    %246 = vmatpush2.msra.mxu0 %v176
    %247 = vmatprep.subr.mxu0 0.0
    %248 = vmatpush2.msra.mxu0 %v175
    %249 = vmatprep.subr.mxu0 0.0
    %250 = vmatpush2.msra.mxu0 %v174
    %251 = vmatprep.subr.mxu0 0.0
    %252 = vmatpush2.msra.mxu0 %v173
    %253 = vmatprep.subr.mxu0 0.0
    %254 = vmatpush2.msra.mxu0 %v172
    %255 = vmatprep.mubr.f32.mxu0 %v189
    %256 = vmatmul.mubr.f32.gmra.mxu0 %v154
    %v257 = vpop.f32.mrf.mxu0
    %v258 = vadd.f32 %v185, %v257
    %v259 = vpop.f32.mrf.mxu0
    %260 = vdwg.mxu0
    %v261 = vmax.f32 %v258, 0.0
    %v262 = vld [vmem:[#allocation4] sm:$0xff]
    %v263 = vld [vmem:[#allocation4 + $0x8] sm:$0xff]
    %v264 = vld [vmem:[#allocation4 + $0x10] sm:$0xff]
    %v265 = vld [vmem:[#allocation4 + $0x18] sm:$0xff]
    %v266 = vld [vmem:[#allocation4 + $0x20] sm:$0xff]
    %v267 = vld [vmem:[#allocation4 + $0x28] sm:$0xff]
    %v268 = vld [vmem:[#allocation4 + $0x30] sm:$0xff]
    %v269 = vld [vmem:[#allocation4 + $0x38] sm:$0xff]
    %v270 = vld [vmem:[#allocation4 + $0x40] sm:$0xff]
    %v271 = vld [vmem:[#allocation4 + $0x48] sm:$0xff]
    %v272 = vld [vmem:[#allocation4 + $0x50] sm:$0xff]
    %v273 = vld [vmem:[#allocation4 + $0x58] sm:$0xff]
    %v274 = vld [vmem:[%s6] sm:$0x1]
    %v276 = vlaneseq
    %v277 = vshrl.u32 %v276, 7
    %v278 = vsub.s32 0, %v277
    %v279 = vrot.slane %v274, %v278
    %vm281 = vcmask 785408
    %v283 = vsel %vm281, %v261, 0
    %285 = vmatprep.subr.mxu0 0.0
    %286 = vmatpush1.msra.mxu0 0.0
    %287 = vmatprep.subr.mxu0 0.0
    %288 = vmatpush1.msra.mxu0 0.0
    %289 = vmatprep.subr.mxu0 0.0
    %290 = vmatpush1.msra.mxu0 0.0
    %291 = vmatprep.subr.mxu0 0.0
    %292 = vmatpush1.msra.mxu0 0.0
    %293 = vmatprep.subr.mxu0 0.0
    %294 = vmatpush1.msra.mxu0 %v273
    %295 = vmatprep.subr.mxu0 0.0
    %296 = vmatpush1.msra.mxu0 %v272
    %297 = vmatprep.subr.mxu0 0.0
    %298 = vmatpush1.msra.mxu0 %v271
    %299 = vmatprep.subr.mxu0 0.0
    %300 = vmatpush1.msra.mxu0 %v270
    %301 = vmatprep.subr.mxu0 0.0
    %302 = vmatpush1.msra.mxu0 %v269
    %303 = vmatprep.subr.mxu0 0.0
    %304 = vmatpush1.msra.mxu0 %v268
    %305 = vmatprep.subr.mxu0 0.0
    %306 = vmatpush1.msra.mxu0 %v267
    %307 = vmatprep.subr.mxu0 0.0
    %308 = vmatpush1.msra.mxu0 %v266
    %309 = vmatprep.subr.mxu0 0.0
    %310 = vmatpush1.msra.mxu0 %v265
    %311 = vmatprep.subr.mxu0 0.0
    %312 = vmatpush1.msra.mxu0 %v264
    %313 = vmatprep.subr.mxu0 0.0
    %314 = vmatpush1.msra.mxu0 %v263
    %315 = vmatprep.subr.mxu0 0.0
    %316 = vmatpush1.msra.mxu0 %v262
    %317 = vmatprep.subr.mxu0 0.0
    %318 = vmatpush2.msra.mxu0 0.0
    %319 = vmatprep.subr.mxu0 0.0
    %320 = vmatpush2.msra.mxu0 0.0
    %321 = vmatprep.subr.mxu0 0.0
    %322 = vmatpush2.msra.mxu0 0.0
    %323 = vmatprep.subr.mxu0 0.0
    %324 = vmatpush2.msra.mxu0 0.0
    %325 = vmatprep.subr.mxu0 0.0
    %326 = vmatpush2.msra.mxu0 0.0
    %327 = vmatprep.subr.mxu0 0.0
    %328 = vmatpush2.msra.mxu0 0.0
    %329 = vmatprep.subr.mxu0 0.0
    %330 = vmatpush2.msra.mxu0 0.0
    %331 = vmatprep.subr.mxu0 0.0
    %332 = vmatpush2.msra.mxu0 0.0
    %333 = vmatprep.subr.mxu0 0.0
    %334 = vmatpush2.msra.mxu0 0.0
    %335 = vmatprep.subr.mxu0 0.0
    %336 = vmatpush2.msra.mxu0 0.0
    %337 = vmatprep.subr.mxu0 0.0
    %338 = vmatpush2.msra.mxu0 0.0
    %339 = vmatprep.subr.mxu0 0.0
    %340 = vmatpush2.msra.mxu0 0.0
    %341 = vmatprep.subr.mxu0 0.0
    %342 = vmatpush2.msra.mxu0 0.0
    %343 = vmatprep.subr.mxu0 0.0
    %344 = vmatpush2.msra.mxu0 0.0
    %345 = vmatprep.subr.mxu0 0.0
    %346 = vmatpush2.msra.mxu0 0.0
    %347 = vmatprep.subr.mxu0 0.0
    %348 = vmatpush2.msra.mxu0 0.0
    %349 = vmatprep.mubr.f32.mxu0 0.0
    %350 = vmatmul.mubr.f32.gmra.mxu0 %v283
    %v351 = vpop.f32.mrf.mxu0
    %v352 = vadd.f32 %v279, %v351
    %v353 = vpop.f32.mrf.mxu0
    %354 = vdwg.mxu0
    %355 = vst [vmem:[%s7] sm:$0xff] %v352
    // Predicated region
    $region38: #{qnet_forward.1} parent=1 // pred_check
      _
    $region39: #{qnet_forward.1} parent=1 // pred_check_branch
      %357 = sbr.rel (0) target = $region41
    $region40: #{qnet_forward.1} parent=1 // pred_region
      _
    $region41: #{qnet_forward.1} parent=1 // pred_fallthru
      _
    // Predicated region
    $region42: #{qnet_forward.1} parent=1 // pred_check
      _
    $region43: #{qnet_forward.1} parent=1 // pred_check_branch
      %359 = sbr.rel (0) target = $region45
    $region44: #{qnet_forward.1} parent=1 // pred_region
      _
    $region45: #{qnet_forward.1} parent=1 // pred_fallthru
      _
    %360 = vsyncpa [#allocation3], 1
    %361 = vsyncpa [#allocation5], 1

</llo_original>
